<compile_context>
chip_gen: v7x
topology: tpu7x:2x2x1
jax: 0.10.0
libtpu: 0.0.40
codegen_flags: <defaults>
</compile_context>

<pallas_src>
import functools

import jax
import jax.numpy as jnp
from jax import lax
from jax.experimental import pallas as pl
from jax.experimental.pallas import tpu as pltpu


def _smooth_l1_kernel(p_ref, t_ref, m_ref, out_ref, acc_ref, *, D, rows, need_guard):
    """One (block_rows, lane) tile: accumulate masked smooth-L1, reduce at end."""
    i = pl.program_id(1)                 # reduction ("arbitrary") axis
    n_inner = pl.num_programs(1)

    @pl.when(i == 0)
    def _():
        acc_ref[...] = jnp.zeros_like(acc_ref)

    p = p_ref[...]
    t = t_ref[...]
    if p.dtype != jnp.float32:
        p = p.astype(jnp.float32)
    if t.dtype != jnp.float32:
        t = t.astype(jnp.float32)

    dif = jnp.abs(p - t)
    l = jnp.where(dif <= 1.0, 0.5 * dif * dif, dif - 0.5)

    block_rows, lane = l.shape

    if need_guard:
        # Rows past the logical end (partial edge block, or a clamped duplicate
        # block when the core split does not divide the block count) are zeroed
        # with a select (NaN-safe: edge-block fill data is unspecified).
        gblock = pl.program_id(0) * n_inner + i
        row_ids = gblock * block_rows + lax.broadcasted_iota(jnp.int32, l.shape, 0)
        l = jnp.where(row_ids < rows, l, 0.0)

    # Expand the compact (block_rows, lane//D) 0/1 row mask to element
    # granularity via a 0/1 matmul on the otherwise-idle MXU.  Edge-block mask
    # fill is finite (int8) and the matching rows of `l` are already zero.
    m = m_ref[...].astype(jnp.float32)                       # (block_rows, lane//D)
    if D == 1:
        m_exp = m
    else:
        cols = m_ref.shape[1]
        pos_ids = lax.broadcasted_iota(jnp.int32, (cols, lane), 0)
        lane_ids = lax.broadcasted_iota(jnp.int32, (cols, lane), 1)
        expand = (lane_ids >= pos_ids * D) & (lane_ids < (pos_ids + 1) * D)
        m_exp = jnp.dot(m, expand.astype(jnp.float32),
                        preferred_element_type=jnp.float32)  # (block_rows, lane)

    acc_ref[...] += l * m_exp                                 # pure VPU accumulation

    @pl.when(i == n_inner - 1)
    def _():
        # One-time XLU reduction down to a single lane-row per core.
        out_ref[...] = jnp.sum(acc_ref[...], axis=0, keepdims=True)[None]


def _masked_smooth_l1_sum(preds, targets, pos_mask):
    """Fused XLA fallback: sum of masked smooth-L1 terms."""
    dif = jnp.abs(preds.astype(jnp.float32) - targets.astype(jnp.float32))
    l = jnp.where(dif <= 1.0, 0.5 * dif * dif, dif - 0.5)
    return jnp.sum(l * pos_mask.astype(jnp.float32)[..., None])


def _default_core_split():
    try:
        return max(1, int(getattr(jax.devices()[0], "num_cores", 1)))
    except Exception:  # pragma: no cover - perf knob only
        return 1


@functools.partial(jax.jit,
                   static_argnames=("block_rows", "n_split", "min_pallas_elems"))
def smooth_l1(preds, targets, pos_mask, *, block_rows=512, n_split=None,
              min_pallas_elems=1 << 18):
    """preds/targets: (B, N, D) (or (B, N)); pos_mask: (B, N) bool. Scalar f32."""
    if preds.ndim == pos_mask.ndim:          # e.g. the cnt head: (B, N)
        preds = preds[..., None]
        targets = targets[..., None]
    assert preds.shape == targets.shape
    assert pos_mask.shape == preds.shape[:-1]
    assert block_rows % 32 == 0

    D = preds.shape[-1]
    total = preds.size

    # Divisor: number of positive ROWS (PyTorch: len(preds[pos_mask])).
    pos_num = jnp.maximum(jnp.sum(pos_mask.astype(jnp.float32)), 1.0)

    # Lane-dense view: widest lane in {512, 256, 128} that divides the flat
    # element count and is a multiple of D (one mask column -> D lanes).
    lane = next((c for c in (512, 256, 128)
                 if c % D == 0 and total % c == 0), None)

    if lane is None or total < min_pallas_elems or total < 8 * lane:
        # TODO(synk): awkward shapes (flat size not a multiple of 128, or D not
        # dividing 128) use the fused XLA path instead of a pad/slice copy.
        return _masked_smooth_l1_sum(preds, targets, pos_mask) / pos_num

    cols = lane // D
    rows = total // lane
    bR = rows if rows <= block_rows else block_rows
    nblocks = pl.cdiv(rows, bR)

    if n_split is None:
        cores = _default_core_split()
        n_split = cores if (cores > 1 and nblocks % cores == 0) else 1
    n_split = max(1, min(n_split, nblocks))
    inner = pl.cdiv(nblocks, n_split)
    need_guard = (rows % bR != 0) or (nblocks % n_split != 0)

    # Free (contiguous) reshapes -- no data movement in the wrapper.
    p2 = preds.reshape(rows, lane)
    t2 = targets.reshape(rows, lane)
    m2 = pos_mask.reshape(rows, cols).astype(jnp.int8)       # compact row mask

    def data_map(c, i):
        # Clamp so DMAs always target an in-bounds block; logically
        # out-of-range iterations are zeroed by the in-kernel guard.
        return (jnp.minimum(c * inner + i, nblocks - 1), 0)

    def out_map(c, i):
        return (c, 0, 0)

    partials = pl.pallas_call(
        functools.partial(_smooth_l1_kernel, D=D, rows=rows, need_guard=need_guard),
        out_shape=jax.ShapeDtypeStruct((n_split, 1, lane), jnp.float32),
        grid_spec=pltpu.PrefetchScalarGridSpec(
            num_scalar_prefetch=0,
            grid=(n_split, inner),
            in_specs=[
                pl.BlockSpec((bR, lane), data_map),
                pl.BlockSpec((bR, lane), data_map),
                pl.BlockSpec((bR, cols), data_map),
            ],
            out_specs=pl.BlockSpec((1, 1, lane), out_map),
            scratch_shapes=[pltpu.VMEM((bR, lane), jnp.float32)],
        ),
        compiler_params=pltpu.CompilerParams(
            dimension_semantics=("parallel", "arbitrary")),
    )(p2, t2, m2)

    # Tiny (<= 2 KiB) final reduce + normalization; fuses with the division.
    return jnp.sum(partials) / pos_num


def smooth_l1_ref(preds, targets, pos_mask):
    m = pos_mask.astype(jnp.float32)[..., None]
    dif = jnp.abs(preds.astype(jnp.float32) - targets.astype(jnp.float32))
    l = jnp.where(dif <= 1.0, 0.5 * dif * dif, dif - 0.5) * m
    pos_num = jnp.maximum(jnp.sum(m[..., 0]), 1.0)
    return jnp.sum(l) / pos_num


if __name__ == "__main__":
    key = jax.random.PRNGKey(0)
    ks = jax.random.split(key, 12)

    def check(out, expect, name):
        out = jax.block_until_ready(out)
        assert jnp.allclose(out, expect, rtol=1e-5, atol=1e-6), (name, out, expect)

    # 1) Small shape consistent with the reg head (batch=2, 512 anchors, 4 box
    #    coords); min_pallas_elems=0 forces the Pallas path (single block).
    B, N, D = 2, 512, 4
    preds = jax.random.normal(ks[0], (B, N, D), dtype=jnp.float32)
    targets = jax.random.normal(ks[1], (B, N, D), dtype=jnp.float32)
    pos_mask = jax.random.uniform(ks[2], (B, N)) > 0.7
    check(smooth_l1(preds, targets, pos_mask, min_pallas_elems=0),
          smooth_l1_ref(preds, targets, pos_mask), "small")

    # 2) Multi-block grid with an explicit 2-way core split (nblocks % 2 == 0,
    #    so no clamped duplicate block ever runs).
    B2, N2, D2 = 4, 4096, 4
    preds2 = jax.random.normal(ks[3], (B2, N2, D2), dtype=jnp.float32)
    targets2 = jax.random.normal(ks[4], (B2, N2, D2), dtype=jnp.float32)
    pos_mask2 = jax.random.uniform(ks[5], (B2, N2)) > 0.7
    check(smooth_l1(preds2, targets2, pos_mask2, block_rows=32, n_split=2,
                    min_pallas_elems=0),
          smooth_l1_ref(preds2, targets2, pos_mask2), "multi-block")

    # 3) Partial edge block (rows % block_rows != 0) -> in-kernel guard path.
    B3, N3, D3 = 2, 6144, 4
    preds3 = jax.random.normal(ks[6], (B3, N3, D3), dtype=jnp.float32)
    targets3 = jax.random.normal(ks[7], (B3, N3, D3), dtype=jnp.float32)
    pos_mask3 = jax.random.uniform(ks[8], (B3, N3)) > 0.7
    check(smooth_l1(preds3, targets3, pos_mask3, block_rows=64,
                    min_pallas_elems=0),
          smooth_l1_ref(preds3, targets3, pos_mask3), "edge-guard")

    # 4) Awkward shape (D=3, flat size not a multiple of 128) -> XLA fallback.
    B4, N4, D4 = 2, 50, 3
    preds4 = jax.random.normal(ks[9], (B4, N4, D4), dtype=jnp.float32)
    targets4 = jax.random.normal(ks[10], (B4, N4, D4), dtype=jnp.float32)
    pos_mask4 = jax.random.uniform(ks[11], (B4, N4)) > 0.7
    check(smooth_l1(preds4, targets4, pos_mask4),
          smooth_l1_ref(preds4, targets4, pos_mask4), "fallback")

    print("KERNEL_OK")
</pallas_src>

<mosaic_0001>
module attributes {stable_mosaic.version = 11 : i64} {
  func.func @_smooth_l1_kernel(%arg0: i32, %arg1: i32, %arg2: memref<8x512xf32, #tpu.memory_space<vmem>>, %arg3: memref<8x512xf32, #tpu.memory_space<vmem>>, %arg4: memref<8x128xi8, #tpu.memory_space<vmem>>, %arg5: memref<1x1x512xf32, #tpu.memory_space<vmem>>, %arg6: memref<8x512xf32, #tpu.memory_space<vmem>>) attributes {dimension_semantics = [#tpu.dimension_semantics<parallel>, #tpu.dimension_semantics<arbitrary>], iteration_bounds = array<i64: 1, 1>, scalar_prefetch = 0 : i64, scratch_operands = 1 : i64, tpu.core_type = #tpu.core_type<tc>, window_params = [{transform_indices = @transform_0, window_bounds = array<i64: 8, 512>}, {transform_indices = @transform_1, window_bounds = array<i64: 8, 512>}, {transform_indices = @transform_2, window_bounds = array<i64: 8, 128>}, {transform_indices = @transform_3, window_bounds = array<i64: 1, 1, 512>}]} {
    %c0_i32 = arith.constant 0 : i32
    %0 = arith.cmpi eq, %arg1, %c0_i32 : i32
    %1 = arith.extui %0 : i1 to i32
    %c0_i32_0 = arith.constant 0 : i32
    %2 = arith.cmpi ne, %1, %c0_i32_0 : i32
    scf.if %2 {
      %cst_16 = arith.constant 0.000000e+00 : f32
      %38 = vector.broadcast %cst_16 : f32 to vector<8x512xf32>
      %c0_17 = arith.constant 0 : index
      %c0_18 = arith.constant 0 : index
      %39 = vector.load %arg6[%c0_17, %c0_18] : memref<8x512xf32, #tpu.memory_space<vmem>>, vector<8x512xf32>
      tpu.vector_store %arg6[%c0_17, %c0_18], %38 {strides = array<i32>} : memref<8x512xf32, #tpu.memory_space<vmem>>, vector<8x512xf32>,
    } else {
    }
    %c0 = arith.constant 0 : index
    %c0_1 = arith.constant 0 : index
    %3 = vector.load %arg2[%c0, %c0_1] : memref<8x512xf32, #tpu.memory_space<vmem>>, vector<8x512xf32>
    %c0_2 = arith.constant 0 : index
    %c0_3 = arith.constant 0 : index
    %4 = vector.load %arg3[%c0_2, %c0_3] : memref<8x512xf32, #tpu.memory_space<vmem>>, vector<8x512xf32>
    %5 = arith.subf %3, %4 : vector<8x512xf32>
    %6 = math.absf %5 : vector<8x512xf32>
    %cst = arith.constant 1.000000e+00 : f32
    %7 = vector.broadcast %cst : f32 to vector<8x512xf32>
    %8 = arith.cmpf ole, %6, %7 : vector<8x512xf32>
    %cst_4 = arith.constant 5.000000e-01 : f32
    %9 = vector.broadcast %cst_4 : f32 to vector<8x512xf32>
    %10 = arith.mulf %9, %6 : vector<8x512xf32>
    %11 = arith.mulf %10, %6 : vector<8x512xf32>
    %cst_5 = arith.constant 5.000000e-01 : f32
    %12 = vector.broadcast %cst_5 : f32 to vector<8x512xf32>
    %13 = arith.subf %6, %12 : vector<8x512xf32>
    %14 = arith.select %8, %11, %13 : vector<8x512xi1>, vector<8x512xf32>
    %c0_6 = arith.constant 0 : index
    %c0_7 = arith.constant 0 : index
    %15 = vector.load %arg4[%c0_6, %c0_7] : memref<8x128xi8, #tpu.memory_space<vmem>>, vector<8x128xi8>
    %16 = arith.sitofp %15 : vector<8x128xi8> to vector<8x128xf32>
    %17 = tpu.iota {dimensions = array<i32: 0>} : vector<128x512xi32>
    %18 = tpu.iota {dimensions = array<i32: 1>} : vector<128x512xi32>
    %c4_i32 = arith.constant 4 : i32
    %19 = vector.broadcast %c4_i32 : i32 to vector<128x512xi32>
    %20 = arith.muli %17, %19 : vector<128x512xi32>
    %21 = arith.cmpi sge, %18, %20 : vector<128x512xi32>
    %c1_i32 = arith.constant 1 : i32
    %22 = vector.broadcast %c1_i32 : i32 to vector<128x512xi32>
    %23 = arith.addi %17, %22 : vector<128x512xi32>
    %c4_i32_8 = arith.constant 4 : i32
    %24 = vector.broadcast %c4_i32_8 : i32 to vector<128x512xi32>
    %25 = arith.muli %23, %24 : vector<128x512xi32>
    %26 = arith.cmpi slt, %18, %25 : vector<128x512xi32>
    %27 = arith.andi %21, %26 : vector<128x512xi1>
    %28 = arith.extui %27 : vector<128x512xi1> to vector<128x512xi32>
    %29 = arith.sitofp %28 : vector<128x512xi32> to vector<128x512xf32>
    %cst_9 = arith.constant dense<0.000000e+00> : vector<8x512xf32>
    %30 = tpu.matmul %16, %29, %cst_9 {dimension_numbers = #tpu.dot_dimension_numbers<[1], [0], [0], [1], [0, 0, 1, 1], [], []>} : vector<8x128xf32>, vector<128x512xf32>, vector<8x512xf32> -> vector<8x512xf32>
    %c0_10 = arith.constant 0 : index
    %c0_11 = arith.constant 0 : index
    %31 = vector.load %arg6[%c0_10, %c0_11] : memref<8x512xf32, #tpu.memory_space<vmem>>, vector<8x512xf32>
    %32 = arith.mulf %14, %30 : vector<8x512xf32>
    %33 = arith.addf %31, %32 : vector<8x512xf32>
    %c0_12 = arith.constant 0 : index
    %c0_13 = arith.constant 0 : index
    %34 = vector.load %arg6[%c0_12, %c0_13] : memref<8x512xf32, #tpu.memory_space<vmem>>, vector<8x512xf32>
    tpu.vector_store %arg6[%c0_12, %c0_13], %33 {strides = array<i32>} : memref<8x512xf32, #tpu.memory_space<vmem>>, vector<8x512xf32>,
    %c0_i32_14 = arith.constant 0 : i32
    %35 = arith.cmpi eq, %arg1, %c0_i32_14 : i32
    %36 = arith.extui %35 : i1 to i32
    %c0_i32_15 = arith.constant 0 : i32
    %37 = arith.cmpi ne, %36, %c0_i32_15 : i32
    scf.if %37 {
      %c0_16 = arith.constant 0 : index
      %c0_17 = arith.constant 0 : index
      %38 = vector.load %arg6[%c0_16, %c0_17] : memref<8x512xf32, #tpu.memory_space<vmem>>, vector<8x512xf32>
      %cst_18 = arith.constant dense<0.000000e+00> : vector<512xf32>
      %39 = vector.multi_reduction <add>, %38, %cst_18 [0] : vector<8x512xf32> to vector<512xf32>
      %40 = vector.shape_cast %39 : vector<512xf32> to vector<1x512xf32>
      %41 = vector.shape_cast %40 : vector<1x512xf32> to vector<1x1x512xf32>
      %c0_19 = arith.constant 0 : index
      %c0_20 = arith.constant 0 : index
      %c0_21 = arith.constant 0 : index
      %42 = vector.load %arg5[%c0_19, %c0_20, %c0_21] : memref<1x1x512xf32, #tpu.memory_space<vmem>>, vector<1x1x512xf32>
      tpu.vector_store %arg5[%c0_19, %c0_20, %c0_21], %41 {strides = array<i32>} : memref<1x1x512xf32, #tpu.memory_space<vmem>>, vector<1x1x512xf32>,
    } else {
    }
    return
  }
  func.func @transform_0(%arg0: i32, %arg1: i32) -> (i32, i32) {
    %c1_i32 = arith.constant 1 : i32
    %0 = arith.muli %arg0, %c1_i32 : i32
    %1 = arith.addi %0, %arg1 : i32
    %c0_i32 = arith.constant 0 : i32
    %2 = arith.minsi %1, %c0_i32 : i32
    %c0_i32_0 = arith.constant 0 : i32
    %c0_i32_1 = arith.constant 0 : i32
    return %2, %c0_i32_0 : i32, i32
  }
  func.func @transform_1(%arg0: i32, %arg1: i32) -> (i32, i32) {
    %c1_i32 = arith.constant 1 : i32
    %0 = arith.muli %arg0, %c1_i32 : i32
    %1 = arith.addi %0, %arg1 : i32
    %c0_i32 = arith.constant 0 : i32
    %2 = arith.minsi %1, %c0_i32 : i32
    %c0_i32_0 = arith.constant 0 : i32
    %c0_i32_1 = arith.constant 0 : i32
    return %2, %c0_i32_0 : i32, i32
  }
  func.func @transform_2(%arg0: i32, %arg1: i32) -> (i32, i32) {
    %c1_i32 = arith.constant 1 : i32
    %0 = arith.muli %arg0, %c1_i32 : i32
    %1 = arith.addi %0, %arg1 : i32
    %c0_i32 = arith.constant 0 : i32
    %2 = arith.minsi %1, %c0_i32 : i32
    %c0_i32_0 = arith.constant 0 : i32
    %c0_i32_1 = arith.constant 0 : i32
    return %2, %c0_i32_0 : i32, i32
  }
  func.func @transform_3(%arg0: i32, %arg1: i32) -> (i32, i32, i32) {
    %c0_i32 = arith.constant 0 : i32
    %c0_i32_0 = arith.constant 0 : i32
    %c0_i32_1 = arith.constant 0 : i32
    return %arg0, %c0_i32, %c0_i32_0 : i32, i32, i32
  }
}

</mosaic_0001>

<llo_original>
// kernel: smooth_l1.1
$region0: #{smooth_l1.1}
  #allocation0 [shape = 'u32[]', space=smem, size = 0x4, offset = 0x4, fixed_abs, tag = 'smem constant byte address 0x4 - core index']
  #allocation1 [shape = 'u32[144,128]{1,0:T(1,128)}', space=vmem, size = 0x12000, scoped, tag = 'internal scratch']
  #allocation2 [shape = 'f32[8,512]{1,0:T(8,128)}', space=vmem, size = 0x4000, scoped, tag = 'scratch operand']
  %s0 = inlined_call_operand.vmem [shape: f32[8,512], index: 0, kind: input, shape index: {}]
  %s1 = inlined_call_operand.vmem [shape: f32[8,512], index: 1, kind: input, shape index: {}]
  %s2 = inlined_call_operand.vmem [shape: s8[8,128], index: 2, kind: input, shape index: {}]
  %s3 = inlined_call_operand.vmem [shape: f32[1,1,512], index: 3, kind: output, shape index: {}]
  %s4 = sld [smem:[#allocation0]]
  $region30: #{smooth_l1.1} parent=0
    _
  %s6 = ssub.s32 1, %s4
  %s7 = scalar_select 0, %s6, %s4
  // Predicated region
  $region2: #{smooth_l1.1} parent=0 // pred_check
    _
  $region3: #{smooth_l1.1} parent=0 // pred_check_branch
    %9 = sbr.rel (0) target = $region5
  $region4: #{smooth_l1.1} parent=0 // pred_region
    %s10 = sadd.s32 0, 0
    %p11 = scmp.lt.s32.totalorder %s10, 0
    %s12 = scalar_select %p11, %s10, 0
    %p13 = scmp.lt.s32.totalorder %s12, 0
    %s14 = scalar_select %p13, %s12, 0
    %s15 = smul.addr %s14, 4
    %s16 = smul.addr %s15, 8
    %s17 = scalar_lea.vmem %s0, %s16
    %s18 = sadd.s32 0, 0
    %p19 = scmp.lt.s32.totalorder %s18, 0
    %s20 = scalar_select %p19, %s18, 0
  $region5: #{smooth_l1.1} parent=0 // pred_fallthru
    _
  // Predicated region
  $region6: #{smooth_l1.1} parent=0 // pred_check
    _
  $region7: #{smooth_l1.1} parent=0 // pred_check_branch
    %22 = sbr.rel (0) target = $region9
  $region8: #{smooth_l1.1} parent=0 // pred_region
    %s23 = sadd.s32 0, 0
    %p24 = scmp.lt.s32.totalorder %s23, 0
    %s25 = scalar_select %p24, %s23, 0
    %p26 = scmp.lt.s32.totalorder %s25, 0
    %s27 = scalar_select %p26, %s25, 0
    %s28 = smul.addr %s27, 4
    %s29 = smul.addr %s28, 8
    %s30 = scalar_lea.vmem %s1, %s29
    %s31 = sadd.s32 0, 0
    %p32 = scmp.lt.s32.totalorder %s31, 0
    %s33 = scalar_select %p32, %s31, 0
  $region9: #{smooth_l1.1} parent=0 // pred_fallthru
    _
  // Predicated region
  $region10: #{smooth_l1.1} parent=0 // pred_check
    _
  $region11: #{smooth_l1.1} parent=0 // pred_check_branch
    %35 = sbr.rel (0) target = $region13
  $region12: #{smooth_l1.1} parent=0 // pred_region
    %s36 = sadd.s32 0, 0
    %p37 = scmp.lt.s32.totalorder %s36, 0
    %s38 = scalar_select %p37, %s36, 0
    %p39 = scmp.lt.s32.totalorder %s38, 0
    %s40 = scalar_select %p39, %s38, 0
    %s41 = smul.addr %s40, 2
    %s42 = scalar_lea.vmem %s2, %s41
    %s43 = sadd.s32 0, 0
    %p44 = scmp.lt.s32.totalorder %s43, 0
    %s45 = scalar_select %p44, %s43, 0
  $region13: #{smooth_l1.1} parent=0 // pred_fallthru
    _
  %s46 = sadd.s32 0, 0
  %p47 = scmp.lt.s32.totalorder %s46, 0
  %s48 = scalar_select %p47, %s46, 0
  %p49 = scmp.lt.s32.totalorder %s48, 0
  %s50 = scalar_select %p49, %s48, 0
  %s51 = smul.addr %s50, 4
  %s52 = smul.addr %s51, 8
  %s53 = scalar_lea.vmem %s0, %s52
  %s54 = sadd.s32 0, 0
  %p55 = scmp.lt.s32.totalorder %s54, 0
  %s56 = scalar_select %p55, %s54, 0
  %p57 = scmp.lt.s32.totalorder %s56, 0
  %s58 = scalar_select %p57, %s56, 0
  %s59 = smul.addr %s58, 4
  %s60 = smul.addr %s59, 8
  %s61 = scalar_lea.vmem %s1, %s60
  %s62 = sadd.s32 0, 0
  %p63 = scmp.lt.s32.totalorder %s62, 0
  %s64 = scalar_select %p63, %s62, 0
  %p65 = scmp.lt.s32.totalorder %s64, 0
  %s66 = scalar_select %p65, %s64, 0
  %s67 = smul.addr %s66, 2
  %s68 = scalar_lea.vmem %s2, %s67
  %s69 = sadd.s32 0, 0
  %p70 = scmp.lt.s32.totalorder %s69, 0
  %s71 = scalar_select %p70, %s69, 0
  %p72 = scmp.lt.s32.totalorder %s71, 0
  %s73 = scalar_select %p72, %s71, 0
  %s74 = smul.addr %s73, 4
  %s75 = smul.addr %s74, 8
  %s76 = scalar_lea.vmem %s0, %s75
  %s77 = sadd.s32 0, 0
  %p78 = scmp.lt.s32.totalorder %s77, 0
  %s79 = scalar_select %p78, %s77, 0
  %s80 = sadd.s32 0, 0
  %p81 = scmp.lt.s32.totalorder %s80, 0
  %s82 = scalar_select %p81, %s80, 0
  %p83 = scmp.lt.s32.totalorder %s82, 0
  %s84 = scalar_select %p83, %s82, 0
  %s85 = smul.addr %s84, 4
  %s86 = smul.addr %s85, 8
  %s87 = scalar_lea.vmem %s1, %s86
  %s88 = sadd.s32 0, 0
  %p89 = scmp.lt.s32.totalorder %s88, 0
  %s90 = scalar_select %p89, %s88, 0
  %s91 = sadd.s32 0, 0
  %p92 = scmp.lt.s32.totalorder %s91, 0
  %s93 = scalar_select %p92, %s91, 0
  %p94 = scmp.lt.s32.totalorder %s93, 0
  %s95 = scalar_select %p94, %s93, 0
  %s96 = smul.addr %s95, 2
  %s97 = scalar_lea.vmem %s2, %s96
  %s98 = sadd.s32 0, 0
  %p99 = scmp.lt.s32.totalorder %s98, 0
  %s100 = scalar_select %p99, %s98, 0
  %p101 = scmp.eq.s32.totalorder 0, 0
  // Predicated region
  $region14: #{smooth_l1.1} parent=0 // pred_check
    %p102 = pneg %p101
  $region15: #{smooth_l1.1} parent=0 // pred_check_branch
    %104 = sbr.rel (%p102) target = $region17
  $region16: #{smooth_l1.1} parent=0 // pred_region
    %105 = vst [vmem:[#allocation2] sm:$0xff] 0.0
    %106 = vst [vmem:[#allocation2 + $0x8] sm:$0xff] 0.0
    %107 = vst [vmem:[#allocation2 + $0x10] sm:$0xff] 0.0
    %108 = vst [vmem:[#allocation2 + $0x18] sm:$0xff] 0.0
  $region17: #{smooth_l1.1} parent=0 // pred_fallthru
    _
  %v109 = vld [vmem:[%s76] sm:$0xff]
  %v110 = vld [vmem:[%s76 + $0x8] sm:$0xff]
  %v111 = vld [vmem:[%s76 + $0x10] sm:$0xff]
  %v112 = vld [vmem:[%s76 + $0x18] sm:$0xff]
  %v113 = vld [vmem:[%s87] sm:$0xff]
  %v114 = vld [vmem:[%s87 + $0x8] sm:$0xff]
  %v115 = vld [vmem:[%s87 + $0x10] sm:$0xff]
  %v116 = vld [vmem:[%s87 + $0x18] sm:$0xff]
  %v117 = vsub.f32 %v109, %v113
  %v118 = vsub.f32 %v110, %v114
  %v119 = vsub.f32 %v111, %v115
  %v120 = vsub.f32 %v112, %v116
  %v121 = vand.u32 2147483647, %v117
  %v122 = vand.u32 2147483647, %v118
  %v123 = vand.u32 2147483647, %v119
  %v124 = vand.u32 2147483647, %v120
  %vm125 = vcmp.le.f32.partialorder %v121, 1.0
  %vm126 = vcmp.le.f32.partialorder %v122, 1.0
  %vm127 = vcmp.le.f32.partialorder %v123, 1.0
  %vm128 = vcmp.le.f32.partialorder %v124, 1.0
  %v129 = vmul.f32 %v121, 0.5
  %v130 = vmul.f32 %v122, 0.5
  %v131 = vmul.f32 %v123, 0.5
  %v132 = vmul.f32 %v124, 0.5
  %v133 = vmul.f32 %v129, %v121
  %v134 = vmul.f32 %v130, %v122
  %v135 = vmul.f32 %v131, %v123
  %v136 = vmul.f32 %v132, %v124
  %v137 = vsub.f32 %v121, 0.5
  %v138 = vsub.f32 %v122, 0.5
  %v139 = vsub.f32 %v123, 0.5
  %v140 = vsub.f32 %v124, 0.5
  %v141 = vsel %vm125, %v133, %v137
  %v142 = vsel %vm126, %v134, %v138
  %v143 = vsel %vm127, %v135, %v139
  %v144 = vsel %vm128, %v136, %v140
  %v145 = vld [vmem:[%s97] sm:$0x3]
  %v146 = vunpack.c.0.s8 %v145
  %v147 = vcvt.s32.f32 %v146
  %v148 = vlaneseq
  %v149 = vshrl.u32 %v148, 7
  %v150 = vadd.s32 %v149, 8
  %v151 = vadd.s32 %v149, 16
  %v152 = vadd.s32 %v149, 24
  %v153 = vadd.s32 %v149, 32
  %v154 = vadd.s32 %v149, 40
  %v155 = vadd.s32 %v149, 48
  %v156 = vadd.s32 %v149, 56
  %v157 = vadd.s32 %v149, 64
  %v158 = vadd.s32 %v149, 72
  %v159 = vadd.s32 %v149, 80
  %v160 = vadd.s32 %v149, 88
  %v161 = vadd.s32 %v149, 96
  %v162 = vadd.s32 %v149, 104
  %v163 = vadd.s32 %v149, 112
  %v164 = vadd.s32 %v149, 120
  %v165 = vlaneseq
  %v166 = vand.u32 %v165, 127
  %v167 = vadd.s32 %v166, 128
  %v168 = vadd.s32 %v166, 256
  %v169 = vadd.s32 %v166, 384
  %v170 = vmul.u32 %v149, 4
  %v171 = vmul.u32 %v150, 4
  %v172 = vmul.u32 %v151, 4
  %v173 = vmul.u32 %v152, 4
  %v174 = vmul.u32 %v153, 4
  %v175 = vmul.u32 %v154, 4
  %v176 = vmul.u32 %v155, 4
  %v177 = vmul.u32 %v156, 4
  %v178 = vmul.u32 %v157, 4
  %v179 = vmul.u32 %v158, 4
  %v180 = vmul.u32 %v159, 4
  %v181 = vmul.u32 %v160, 4
  %v182 = vmul.u32 %v161, 4
  %v183 = vmul.u32 %v162, 4
  %v184 = vmul.u32 %v163, 4
  %v185 = vmul.u32 %v164, 4
  %vm186 = vcmp.ge.s32.totalorder %v166, %v170
  %vm187 = vcmp.ge.s32.totalorder %v167, %v170
  %vm188 = vcmp.ge.s32.totalorder %v168, %v170
  %vm189 = vcmp.ge.s32.totalorder %v169, %v170
  %vm190 = vcmp.ge.s32.totalorder %v166, %v171
  %vm191 = vcmp.ge.s32.totalorder %v167, %v171
  %vm192 = vcmp.ge.s32.totalorder %v168, %v171
  %vm193 = vcmp.ge.s32.totalorder %v169, %v171
  %vm194 = vcmp.ge.s32.totalorder %v166, %v172
  %vm195 = vcmp.ge.s32.totalorder %v167, %v172
  %vm196 = vcmp.ge.s32.totalorder %v168, %v172
  %vm197 = vcmp.ge.s32.totalorder %v169, %v172
  %vm198 = vcmp.ge.s32.totalorder %v166, %v173
  %vm199 = vcmp.ge.s32.totalorder %v167, %v173
  %vm200 = vcmp.ge.s32.totalorder %v168, %v173
  %vm201 = vcmp.ge.s32.totalorder %v169, %v173
  %vm202 = vcmp.ge.s32.totalorder %v166, %v174
  %vm203 = vcmp.ge.s32.totalorder %v167, %v174
  %vm204 = vcmp.ge.s32.totalorder %v168, %v174
  %vm205 = vcmp.ge.s32.totalorder %v169, %v174
  %vm206 = vcmp.ge.s32.totalorder %v166, %v175
  %vm207 = vcmp.ge.s32.totalorder %v167, %v175
  %vm208 = vcmp.ge.s32.totalorder %v168, %v175
  %vm209 = vcmp.ge.s32.totalorder %v169, %v175
  %vm210 = vcmp.ge.s32.totalorder %v166, %v176
  %vm211 = vcmp.ge.s32.totalorder %v167, %v176
  %vm212 = vcmp.ge.s32.totalorder %v168, %v176
  %vm213 = vcmp.ge.s32.totalorder %v169, %v176
  %vm214 = vcmp.ge.s32.totalorder %v166, %v177
  %vm215 = vcmp.ge.s32.totalorder %v167, %v177
  %vm216 = vcmp.ge.s32.totalorder %v168, %v177
  %vm217 = vcmp.ge.s32.totalorder %v169, %v177
  %vm218 = vcmp.ge.s32.totalorder %v166, %v178
  %vm219 = vcmp.ge.s32.totalorder %v167, %v178
  %vm220 = vcmp.ge.s32.totalorder %v168, %v178
  %vm221 = vcmp.ge.s32.totalorder %v169, %v178
  %vm222 = vcmp.ge.s32.totalorder %v166, %v179
  %vm223 = vcmp.ge.s32.totalorder %v167, %v179
  %vm224 = vcmp.ge.s32.totalorder %v168, %v179
  %vm225 = vcmp.ge.s32.totalorder %v169, %v179
  %vm226 = vcmp.ge.s32.totalorder %v166, %v180
  %vm227 = vcmp.ge.s32.totalorder %v167, %v180
  %vm228 = vcmp.ge.s32.totalorder %v168, %v180
  %vm229 = vcmp.ge.s32.totalorder %v169, %v180
  %vm230 = vcmp.ge.s32.totalorder %v166, %v181
  %vm231 = vcmp.ge.s32.totalorder %v167, %v181
  %vm232 = vcmp.ge.s32.totalorder %v168, %v181
  %vm233 = vcmp.ge.s32.totalorder %v169, %v181
  %vm234 = vcmp.ge.s32.totalorder %v166, %v182
  %vm235 = vcmp.ge.s32.totalorder %v167, %v182
  %vm236 = vcmp.ge.s32.totalorder %v168, %v182
  %vm237 = vcmp.ge.s32.totalorder %v169, %v182
  %vm238 = vcmp.ge.s32.totalorder %v166, %v183
  %vm239 = vcmp.ge.s32.totalorder %v167, %v183
  %vm240 = vcmp.ge.s32.totalorder %v168, %v183
  %vm241 = vcmp.ge.s32.totalorder %v169, %v183
  %vm242 = vcmp.ge.s32.totalorder %v166, %v184
  %vm243 = vcmp.ge.s32.totalorder %v167, %v184
  %vm244 = vcmp.ge.s32.totalorder %v168, %v184
  %vm245 = vcmp.ge.s32.totalorder %v169, %v184
  %vm246 = vcmp.ge.s32.totalorder %v166, %v185
  %vm247 = vcmp.ge.s32.totalorder %v167, %v185
  %vm248 = vcmp.ge.s32.totalorder %v168, %v185
  %vm249 = vcmp.ge.s32.totalorder %v169, %v185
  %v250 = vadd.s32 %v149, 1
  %v251 = vadd.s32 %v150, 1
  %v252 = vadd.s32 %v151, 1
  %v253 = vadd.s32 %v152, 1
  %v254 = vadd.s32 %v153, 1
  %v255 = vadd.s32 %v154, 1
  %v256 = vadd.s32 %v155, 1
  %v257 = vadd.s32 %v156, 1
  %v258 = vadd.s32 %v157, 1
  %v259 = vadd.s32 %v158, 1
  %v260 = vadd.s32 %v159, 1
  %v261 = vadd.s32 %v160, 1
  %v262 = vadd.s32 %v161, 1
  %v263 = vadd.s32 %v162, 1
  %v264 = vadd.s32 %v163, 1
  %v265 = vadd.s32 %v164, 1
  %v266 = vmul.u32 %v250, 4
  %v267 = vmul.u32 %v251, 4
  %v268 = vmul.u32 %v252, 4
  %v269 = vmul.u32 %v253, 4
  %v270 = vmul.u32 %v254, 4
  %v271 = vmul.u32 %v255, 4
  %v272 = vmul.u32 %v256, 4
  %v273 = vmul.u32 %v257, 4
  %v274 = vmul.u32 %v258, 4
  %v275 = vmul.u32 %v259, 4
  %v276 = vmul.u32 %v260, 4
  %v277 = vmul.u32 %v261, 4
  %v278 = vmul.u32 %v262, 4
  %v279 = vmul.u32 %v263, 4
  %v280 = vmul.u32 %v264, 4
  %v281 = vmul.u32 %v265, 4
  %vm282 = vcmp.lt.s32.totalorder %v166, %v266
  %vm283 = vcmp.lt.s32.totalorder %v167, %v266
  %vm284 = vcmp.lt.s32.totalorder %v168, %v266
  %vm285 = vcmp.lt.s32.totalorder %v169, %v266
  %vm286 = vcmp.lt.s32.totalorder %v166, %v267
  %vm287 = vcmp.lt.s32.totalorder %v167, %v267
  %vm288 = vcmp.lt.s32.totalorder %v168, %v267
  %vm289 = vcmp.lt.s32.totalorder %v169, %v267
  %vm290 = vcmp.lt.s32.totalorder %v166, %v268
  %vm291 = vcmp.lt.s32.totalorder %v167, %v268
  %vm292 = vcmp.lt.s32.totalorder %v168, %v268
  %vm293 = vcmp.lt.s32.totalorder %v169, %v268
  %vm294 = vcmp.lt.s32.totalorder %v166, %v269
  %vm295 = vcmp.lt.s32.totalorder %v167, %v269
  %vm296 = vcmp.lt.s32.totalorder %v168, %v269
  %vm297 = vcmp.lt.s32.totalorder %v169, %v269
  %vm298 = vcmp.lt.s32.totalorder %v166, %v270
  %vm299 = vcmp.lt.s32.totalorder %v167, %v270
  %vm300 = vcmp.lt.s32.totalorder %v168, %v270
  %vm301 = vcmp.lt.s32.totalorder %v169, %v270
  %vm302 = vcmp.lt.s32.totalorder %v166, %v271
  %vm303 = vcmp.lt.s32.totalorder %v167, %v271
  %vm304 = vcmp.lt.s32.totalorder %v168, %v271
  %vm305 = vcmp.lt.s32.totalorder %v169, %v271
  %vm306 = vcmp.lt.s32.totalorder %v166, %v272
  %vm307 = vcmp.lt.s32.totalorder %v167, %v272
  %vm308 = vcmp.lt.s32.totalorder %v168, %v272
  %vm309 = vcmp.lt.s32.totalorder %v169, %v272
  %vm310 = vcmp.lt.s32.totalorder %v166, %v273
  %vm311 = vcmp.lt.s32.totalorder %v167, %v273
  %vm312 = vcmp.lt.s32.totalorder %v168, %v273
  %vm313 = vcmp.lt.s32.totalorder %v169, %v273
  %vm314 = vcmp.lt.s32.totalorder %v166, %v274
  %vm315 = vcmp.lt.s32.totalorder %v167, %v274
  %vm316 = vcmp.lt.s32.totalorder %v168, %v274
  %vm317 = vcmp.lt.s32.totalorder %v169, %v274
  %vm318 = vcmp.lt.s32.totalorder %v166, %v275
  %vm319 = vcmp.lt.s32.totalorder %v167, %v275
  %vm320 = vcmp.lt.s32.totalorder %v168, %v275
  %vm321 = vcmp.lt.s32.totalorder %v169, %v275
  %vm322 = vcmp.lt.s32.totalorder %v166, %v276
  %vm323 = vcmp.lt.s32.totalorder %v167, %v276
  %vm324 = vcmp.lt.s32.totalorder %v168, %v276
  %vm325 = vcmp.lt.s32.totalorder %v169, %v276
  %vm326 = vcmp.lt.s32.totalorder %v166, %v277
  %vm327 = vcmp.lt.s32.totalorder %v167, %v277
  %vm328 = vcmp.lt.s32.totalorder %v168, %v277
  %vm329 = vcmp.lt.s32.totalorder %v169, %v277
  %vm330 = vcmp.lt.s32.totalorder %v166, %v278
  %vm331 = vcmp.lt.s32.totalorder %v167, %v278
  %vm332 = vcmp.lt.s32.totalorder %v168, %v278
  %vm333 = vcmp.lt.s32.totalorder %v169, %v278
  %vm334 = vcmp.lt.s32.totalorder %v166, %v279
  %vm335 = vcmp.lt.s32.totalorder %v167, %v279
  %vm336 = vcmp.lt.s32.totalorder %v168, %v279
  %vm337 = vcmp.lt.s32.totalorder %v169, %v279
  %vm338 = vcmp.lt.s32.totalorder %v166, %v280
  %vm339 = vcmp.lt.s32.totalorder %v167, %v280
  %vm340 = vcmp.lt.s32.totalorder %v168, %v280
  %vm341 = vcmp.lt.s32.totalorder %v169, %v280
  %vm342 = vcmp.lt.s32.totalorder %v166, %v281
  %vm343 = vcmp.lt.s32.totalorder %v167, %v281
  %vm344 = vcmp.lt.s32.totalorder %v168, %v281
  %vm345 = vcmp.lt.s32.totalorder %v169, %v281
  %vm346 = vmand %vm186, %vm282
  %vm347 = vmand %vm187, %vm283
  %vm348 = vmand %vm188, %vm284
  %vm349 = vmand %vm189, %vm285
  %vm350 = vmand %vm190, %vm286
  %vm351 = vmand %vm191, %vm287
  %vm352 = vmand %vm192, %vm288
  %vm353 = vmand %vm193, %vm289
  %vm354 = vmand %vm194, %vm290
  %vm355 = vmand %vm195, %vm291
  %vm356 = vmand %vm196, %vm292
  %vm357 = vmand %vm197, %vm293
  %vm358 = vmand %vm198, %vm294
  %vm359 = vmand %vm199, %vm295
  %vm360 = vmand %vm200, %vm296
  %vm361 = vmand %vm201, %vm297
  %vm362 = vmand %vm202, %vm298
  %vm363 = vmand %vm203, %vm299
  %vm364 = vmand %vm204, %vm300
  %vm365 = vmand %vm205, %vm301
  %vm366 = vmand %vm206, %vm302
  %vm367 = vmand %vm207, %vm303
  %vm368 = vmand %vm208, %vm304
  %vm369 = vmand %vm209, %vm305
  %vm370 = vmand %vm210, %vm306
  %vm371 = vmand %vm211, %vm307
  %vm372 = vmand %vm212, %vm308
  %vm373 = vmand %vm213, %vm309
  %vm374 = vmand %vm214, %vm310
  %vm375 = vmand %vm215, %vm311
  %vm376 = vmand %vm216, %vm312
  %vm377 = vmand %vm217, %vm313
  %vm378 = vmand %vm218, %vm314
  %vm379 = vmand %vm219, %vm315
  %vm380 = vmand %vm220, %vm316
  %vm381 = vmand %vm221, %vm317
  %vm382 = vmand %vm222, %vm318
  %vm383 = vmand %vm223, %vm319
  %vm384 = vmand %vm224, %vm320
  %vm385 = vmand %vm225, %vm321
  %vm386 = vmand %vm226, %vm322
  %vm387 = vmand %vm227, %vm323
  %vm388 = vmand %vm228, %vm324
  %vm389 = vmand %vm229, %vm325
  %vm390 = vmand %vm230, %vm326
  %vm391 = vmand %vm231, %vm327
  %vm392 = vmand %vm232, %vm328
  %vm393 = vmand %vm233, %vm329
  %vm394 = vmand %vm234, %vm330
  %vm395 = vmand %vm235, %vm331
  %vm396 = vmand %vm236, %vm332
  %vm397 = vmand %vm237, %vm333
  %vm398 = vmand %vm238, %vm334
  %vm399 = vmand %vm239, %vm335
  %vm400 = vmand %vm240, %vm336
  %vm401 = vmand %vm241, %vm337
  %vm402 = vmand %vm242, %vm338
  %vm403 = vmand %vm243, %vm339
  %vm404 = vmand %vm244, %vm340
  %vm405 = vmand %vm245, %vm341
  %vm406 = vmand %vm246, %vm342
  %vm407 = vmand %vm247, %vm343
  %vm408 = vmand %vm248, %vm344
  %vm409 = vmand %vm249, %vm345
  %v410 = vsel %vm346, 1, 0
  %v411 = vsel %vm347, 1, 0
  %v412 = vsel %vm348, 1, 0
  %v413 = vsel %vm349, 1, 0
  %v414 = vsel %vm350, 1, 0
  %v415 = vsel %vm351, 1, 0
  %v416 = vsel %vm352, 1, 0
  %v417 = vsel %vm353, 1, 0
  %v418 = vsel %vm354, 1, 0
  %v419 = vsel %vm355, 1, 0
  %v420 = vsel %vm356, 1, 0
  %v421 = vsel %vm357, 1, 0
  %v422 = vsel %vm358, 1, 0
  %v423 = vsel %vm359, 1, 0
  %v424 = vsel %vm360, 1, 0
  %v425 = vsel %vm361, 1, 0
  %v426 = vsel %vm362, 1, 0
  %v427 = vsel %vm363, 1, 0
  %v428 = vsel %vm364, 1, 0
  %v429 = vsel %vm365, 1, 0
  %v430 = vsel %vm366, 1, 0
  %v431 = vsel %vm367, 1, 0
  %v432 = vsel %vm368, 1, 0
  %v433 = vsel %vm369, 1, 0
  %v434 = vsel %vm370, 1, 0
  %v435 = vsel %vm371, 1, 0
  %v436 = vsel %vm372, 1, 0
  %v437 = vsel %vm373, 1, 0
  %v438 = vsel %vm374, 1, 0
  %v439 = vsel %vm375, 1, 0
  %v440 = vsel %vm376, 1, 0
  %v441 = vsel %vm377, 1, 0
  %v442 = vsel %vm378, 1, 0
  %v443 = vsel %vm379, 1, 0
  %v444 = vsel %vm380, 1, 0
  %v445 = vsel %vm381, 1, 0
  %v446 = vsel %vm382, 1, 0
  %v447 = vsel %vm383, 1, 0
  %v448 = vsel %vm384, 1, 0
  %v449 = vsel %vm385, 1, 0
  %v450 = vsel %vm386, 1, 0
  %v451 = vsel %vm387, 1, 0
  %v452 = vsel %vm388, 1, 0
  %v453 = vsel %vm389, 1, 0
  %v454 = vsel %vm390, 1, 0
  %v455 = vsel %vm391, 1, 0
  %v456 = vsel %vm392, 1, 0
  %v457 = vsel %vm393, 1, 0
  %v458 = vsel %vm394, 1, 0
  %v459 = vsel %vm395, 1, 0
  %v460 = vsel %vm396, 1, 0
  %v461 = vsel %vm397, 1, 0
  %v462 = vsel %vm398, 1, 0
  %v463 = vsel %vm399, 1, 0
  %v464 = vsel %vm400, 1, 0
  %v465 = vsel %vm401, 1, 0
  %v466 = vsel %vm402, 1, 0
  %v467 = vsel %vm403, 1, 0
  %v468 = vsel %vm404, 1, 0
  %v469 = vsel %vm405, 1, 0
  %v470 = vsel %vm406, 1, 0
  %v471 = vsel %vm407, 1, 0
  %v472 = vsel %vm408, 1, 0
  %v473 = vsel %vm409, 1, 0
  %v474 = vcvt.s32.f32 %v410
  %v475 = vcvt.s32.f32 %v411
  %v476 = vcvt.s32.f32 %v412
  %v477 = vcvt.s32.f32 %v413
  %v478 = vcvt.s32.f32 %v414
  %v479 = vcvt.s32.f32 %v415
  %v480 = vcvt.s32.f32 %v416
  %v481 = vcvt.s32.f32 %v417
  %v482 = vcvt.s32.f32 %v418
  %v483 = vcvt.s32.f32 %v419
  %v484 = vcvt.s32.f32 %v420
  %v485 = vcvt.s32.f32 %v421
  %v486 = vcvt.s32.f32 %v422
  %v487 = vcvt.s32.f32 %v423
  %v488 = vcvt.s32.f32 %v424
  %v489 = vcvt.s32.f32 %v425
  %v490 = vcvt.s32.f32 %v426
  %v491 = vcvt.s32.f32 %v427
  %v492 = vcvt.s32.f32 %v428
  %v493 = vcvt.s32.f32 %v429
  %v494 = vcvt.s32.f32 %v430
  %v495 = vcvt.s32.f32 %v431
  %v496 = vcvt.s32.f32 %v432
  %v497 = vcvt.s32.f32 %v433
  %v498 = vcvt.s32.f32 %v434
  %v499 = vcvt.s32.f32 %v435
  %v500 = vcvt.s32.f32 %v436
  %v501 = vcvt.s32.f32 %v437
  %v502 = vcvt.s32.f32 %v438
  %v503 = vcvt.s32.f32 %v439
  %v504 = vcvt.s32.f32 %v440
  %v505 = vcvt.s32.f32 %v441
  %v506 = vcvt.s32.f32 %v442
  %v507 = vcvt.s32.f32 %v443
  %v508 = vcvt.s32.f32 %v444
  %v509 = vcvt.s32.f32 %v445
  %v510 = vcvt.s32.f32 %v446
  %v511 = vcvt.s32.f32 %v447
  %v512 = vcvt.s32.f32 %v448
  %v513 = vcvt.s32.f32 %v449
  %v514 = vcvt.s32.f32 %v450
  %v515 = vcvt.s32.f32 %v451
  %v516 = vcvt.s32.f32 %v452
  %v517 = vcvt.s32.f32 %v453
  %v518 = vcvt.s32.f32 %v454
  %v519 = vcvt.s32.f32 %v455
  %v520 = vcvt.s32.f32 %v456
  %v521 = vcvt.s32.f32 %v457
  %v522 = vcvt.s32.f32 %v458
  %v523 = vcvt.s32.f32 %v459
  %v524 = vcvt.s32.f32 %v460
  %v525 = vcvt.s32.f32 %v461
  %v526 = vcvt.s32.f32 %v462
  %v527 = vcvt.s32.f32 %v463
  %v528 = vcvt.s32.f32 %v464
  %v529 = vcvt.s32.f32 %v465
  %v530 = vcvt.s32.f32 %v466
  %v531 = vcvt.s32.f32 %v467
  %v532 = vcvt.s32.f32 %v468
  %v533 = vcvt.s32.f32 %v469
  %v534 = vcvt.s32.f32 %v470
  %v535 = vcvt.s32.f32 %v471
  %v536 = vcvt.s32.f32 %v472
  %v537 = vcvt.s32.f32 %v473
  %538 = vmatprep.subr.mxu0 %v475
  %539 = vmatpush1.msra.mxu0 %v474
  %540 = vmatprep.subr.mxu0 %v479
  %541 = vmatpush1.msra.mxu0 %v478
  %542 = vmatprep.subr.mxu0 %v483
  %543 = vmatpush1.msra.mxu0 %v482
  %544 = vmatprep.subr.mxu0 %v487
  %545 = vmatpush1.msra.mxu0 %v486
  %546 = vmatprep.subr.mxu0 %v491
  %547 = vmatpush1.msra.mxu0 %v490
  %548 = vmatprep.subr.mxu0 %v495
  %549 = vmatpush1.msra.mxu0 %v494
  %550 = vmatprep.subr.mxu0 %v499
  %551 = vmatpush1.msra.mxu0 %v498
  %552 = vmatprep.subr.mxu0 %v503
  %553 = vmatpush1.msra.mxu0 %v502
  %554 = vmatprep.subr.mxu0 %v507
  %555 = vmatpush1.msra.mxu0 %v506
  %556 = vmatprep.subr.mxu0 %v511
  %557 = vmatpush1.msra.mxu0 %v510
  %558 = vmatprep.subr.mxu0 %v515
  %559 = vmatpush1.msra.mxu0 %v514
  %560 = vmatprep.subr.mxu0 %v519
  %561 = vmatpush1.msra.mxu0 %v518
  %562 = vmatprep.subr.mxu0 %v523
  %563 = vmatpush1.msra.mxu0 %v522
  %564 = vmatprep.subr.mxu0 %v527
  %565 = vmatpush1.msra.mxu0 %v526
  %566 = vmatprep.subr.mxu0 %v531
  %567 = vmatpush1.msra.mxu0 %v530
  %568 = vmatprep.subr.mxu0 %v535
  %569 = vmatpush1.msra.mxu0 %v534
  %570 = vmatprep.subr.mxu0 0.0
  %571 = vmatpush1.msra.mxu0 0.0
  %572 = vmatprep.subr.mxu0 0.0
  %573 = vmatpush1.msra.mxu0 0.0
  %574 = vmatprep.subr.mxu0 0.0
  %575 = vmatpush1.msra.mxu0 0.0
  %576 = vmatprep.subr.mxu0 0.0
  %577 = vmatpush1.msra.mxu0 0.0
  %578 = vmatprep.subr.mxu0 0.0
  %579 = vmatpush1.msra.mxu0 0.0
  %580 = vmatprep.subr.mxu0 0.0
  %581 = vmatpush1.msra.mxu0 0.0
  %582 = vmatprep.subr.mxu0 0.0
  %583 = vmatpush1.msra.mxu0 0.0
  %584 = vmatprep.subr.mxu0 0.0
  %585 = vmatpush1.msra.mxu0 0.0
  %586 = vmatprep.subr.mxu0 0.0
  %587 = vmatpush1.msra.mxu0 0.0
  %588 = vmatprep.subr.mxu0 0.0
  %589 = vmatpush1.msra.mxu0 0.0
  %590 = vmatprep.subr.mxu0 0.0
  %591 = vmatpush1.msra.mxu0 0.0
  %592 = vmatprep.subr.mxu0 0.0
  %593 = vmatpush1.msra.mxu0 0.0
  %594 = vmatprep.subr.mxu0 0.0
  %595 = vmatpush1.msra.mxu0 0.0
  %596 = vmatprep.subr.mxu0 0.0
  %597 = vmatpush1.msra.mxu0 0.0
  %598 = vmatprep.subr.mxu0 0.0
  %599 = vmatpush1.msra.mxu0 0.0
  %600 = vmatprep.subr.mxu0 0.0
  %601 = vmatpush1.msra.mxu0 0.0
  %602 = vmatprep.mubr.f32.mxu0 0.0
  %603 = vmatmul.mubr.f32.gmra.mrb[0].mxu0 %v147
  %v604 = vpop.f32.mrb[0].mxu0
  %v605 = vadd.f32 0.0, %v604
  %v606 = vpop.f32.mrb[0].mxu0
  %v607 = vadd.f32 0.0, %v606
  %608 = vdwg.mxu0
  %609 = vmatprep.subr.mxu0 %v477
  %610 = vmatpush1.msra.mxu0 %v476
  %611 = vmatprep.subr.mxu0 %v481
  %612 = vmatpush1.msra.mxu0 %v480
  %613 = vmatprep.subr.mxu0 %v485
  %614 = vmatpush1.msra.mxu0 %v484
  %615 = vmatprep.subr.mxu0 %v489
  %616 = vmatpush1.msra.mxu0 %v488
  %617 = vmatprep.subr.mxu0 %v493
  %618 = vmatpush1.msra.mxu0 %v492
  %619 = vmatprep.subr.mxu0 %v497
  %620 = vmatpush1.msra.mxu0 %v496
  %621 = vmatprep.subr.mxu0 %v501
  %622 = vmatpush1.msra.mxu0 %v500
  %623 = vmatprep.subr.mxu0 %v505
  %624 = vmatpush1.msra.mxu0 %v504
  %625 = vmatprep.subr.mxu0 %v509
  %626 = vmatpush1.msra.mxu0 %v508
  %627 = vmatprep.subr.mxu0 %v513
  %628 = vmatpush1.msra.mxu0 %v512
  %629 = vmatprep.subr.mxu0 %v517
  %630 = vmatpush1.msra.mxu0 %v516
  %631 = vmatprep.subr.mxu0 %v521
  %632 = vmatpush1.msra.mxu0 %v520
  %633 = vmatprep.subr.mxu0 %v525
  %634 = vmatpush1.msra.mxu0 %v524
  %635 = vmatprep.subr.mxu0 %v529
  %636 = vmatpush1.msra.mxu0 %v528
  %637 = vmatprep.subr.mxu0 %v533
  %638 = vmatpush1.msra.mxu0 %v532
  %639 = vmatprep.subr.mxu0 %v537
  %640 = vmatpush1.msra.mxu0 %v536
  %641 = vmatprep.subr.mxu0 0.0
  %642 = vmatpush1.msra.mxu0 0.0
  %643 = vmatprep.subr.mxu0 0.0
  %644 = vmatpush1.msra.mxu0 0.0
  %645 = vmatprep.subr.mxu0 0.0
  %646 = vmatpush1.msra.mxu0 0.0
  %647 = vmatprep.subr.mxu0 0.0
  %648 = vmatpush1.msra.mxu0 0.0
  %649 = vmatprep.subr.mxu0 0.0
  %650 = vmatpush1.msra.mxu0 0.0
  %651 = vmatprep.subr.mxu0 0.0
  %652 = vmatpush1.msra.mxu0 0.0
  %653 = vmatprep.subr.mxu0 0.0
  %654 = vmatpush1.msra.mxu0 0.0
  %655 = vmatprep.subr.mxu0 0.0
  %656 = vmatpush1.msra.mxu0 0.0
  %657 = vmatprep.subr.mxu0 0.0
  %658 = vmatpush1.msra.mxu0 0.0
  %659 = vmatprep.subr.mxu0 0.0
  %660 = vmatpush1.msra.mxu0 0.0
  %661 = vmatprep.subr.mxu0 0.0
  %662 = vmatpush1.msra.mxu0 0.0
  %663 = vmatprep.subr.mxu0 0.0
  %664 = vmatpush1.msra.mxu0 0.0
  %665 = vmatprep.subr.mxu0 0.0
  %666 = vmatpush1.msra.mxu0 0.0
  %667 = vmatprep.subr.mxu0 0.0
  %668 = vmatpush1.msra.mxu0 0.0
  %669 = vmatprep.subr.mxu0 0.0
  %670 = vmatpush1.msra.mxu0 0.0
  %671 = vmatprep.subr.mxu0 0.0
  %672 = vmatpush1.msra.mxu0 0.0
  %673 = vmatprep.mubr.f32.mxu0 0.0
  %674 = vmatmul.mubr.f32.gmra.mrb[0].mxu0 %v147
  %v675 = vpop.f32.mrb[0].mxu0
  %v676 = vadd.f32 0.0, %v675
  %v677 = vpop.f32.mrb[0].mxu0
  %v678 = vadd.f32 0.0, %v677
  %679 = vdwg.mxu0
  %v680 = vld [vmem:[#allocation2] sm:$0xff]
  %v681 = vld [vmem:[#allocation2 + $0x8] sm:$0xff]
  %v682 = vld [vmem:[#allocation2 + $0x10] sm:$0xff]
  %v683 = vld [vmem:[#allocation2 + $0x18] sm:$0xff]
  %v684 = vmul.f32 %v141, %v605
  %v685 = vmul.f32 %v142, %v607
  %v686 = vmul.f32 %v143, %v676
  %v687 = vmul.f32 %v144, %v678
  %v688 = vadd.f32 %v680, %v684
  %v689 = vadd.f32 %v681, %v685
  %v690 = vadd.f32 %v682, %v686
  %v691 = vadd.f32 %v683, %v687
  %692 = vst [vmem:[#allocation2] sm:$0xff] %v688
  %693 = vst [vmem:[#allocation2 + $0x8] sm:$0xff] %v689
  %694 = vst [vmem:[#allocation2 + $0x10] sm:$0xff] %v690
  %695 = vst [vmem:[#allocation2 + $0x18] sm:$0xff] %v691
  // Predicated region
  $region18: #{smooth_l1.1} parent=0 // pred_check
    %p696 = pneg %p101
  $region19: #{smooth_l1.1} parent=0 // pred_check_branch
    %698 = sbr.rel (%p696) target = $region21
  $region20: #{smooth_l1.1} parent=0 // pred_region
    %v699 = vld [vmem:[#allocation2] sm:$0xff]
    %v700 = vld [vmem:[#allocation2 + $0x8] sm:$0xff]
    %v701 = vld [vmem:[#allocation2 + $0x10] sm:$0xff]
    %v702 = vld [vmem:[#allocation2 + $0x18] sm:$0xff]
    %v703 = vrot.slane %v699, 4
    %v704 = vadd.f32 %v699, %v703
    %v705 = vrot.slane %v704, 2
    %v706 = vadd.f32 %v704, %v705
    %v707 = vrot.slane %v706, 1
    %v708 = vadd.f32 %v706, %v707
    %v709 = vrot.slane %v700, 4
    %v710 = vadd.f32 %v700, %v709
    %v711 = vrot.slane %v710, 2
    %v712 = vadd.f32 %v710, %v711
    %v713 = vrot.slane %v712, 1
    %v714 = vadd.f32 %v712, %v713
    %v715 = vrot.slane %v701, 4
    %v716 = vadd.f32 %v701, %v715
    %v717 = vrot.slane %v716, 2
    %v718 = vadd.f32 %v716, %v717
    %v719 = vrot.slane %v718, 1
    %v720 = vadd.f32 %v718, %v719
    %v721 = vrot.slane %v702, 4
    %v722 = vadd.f32 %v702, %v721
    %v723 = vrot.slane %v722, 2
    %v724 = vadd.f32 %v722, %v723
    %v725 = vrot.slane %v724, 1
    %v726 = vadd.f32 %v724, %v725
    %v731 = vcombine.low %v708, %v714
    %v732 = vcombine.low %v720, %v726
    %v734 = vunpack.c.l.s4 1966171168
    %v735 = vunpack.c.0.s8 %v734
    %v736 = vlaneseq
    %v737 = vshrl.u32 %v736, 7
    %v738 = vsub.s32 %v735, %v737
    %v739 = vrot.slane %v731, %v738
    %v741 = vunpack.c.l.s4 1966171168
    %v742 = vunpack.c.0.s8 %v741
    %v743 = vlaneseq
    %v744 = vshrl.u32 %v743, 7
    %v745 = vsub.s32 %v742, %v744
    %v746 = vrot.slane %v732, %v745
    %v747 = vcombine.low %v739, %v746
    %v749 = vunpack.c.l.s4 1966171168
    %v750 = vunpack.c.0.s8 %v749
    %v751 = vlaneseq
    %v752 = vshrl.u32 %v751, 7
    %v753 = vsub.s32 %v750, %v752
    %v754 = vrot.slane %v747, %v753
    %v756 = vlaneseq
    %vm757 = vcmp.ge.s32.totalorder %v756, 0
    %vm758 = vcmp.lt.s32.totalorder %v756, 512
    %vm759 = vmand %vm757, %vm758
    %760 = vst.msk [vmem:[%s3] sm:$0xf] %vm759, %v754
  $region21: #{smooth_l1.1} parent=0 // pred_fallthru
    _
  // Predicated region
  $region22: #{smooth_l1.1} parent=0 // pred_check
    _
  $region23: #{smooth_l1.1} parent=0 // pred_check_branch
    %762 = sbr.rel (0) target = $region25
  $region24: #{smooth_l1.1} parent=0 // pred_region
    _
  $region25: #{smooth_l1.1} parent=0 // pred_fallthru
    _
  // Predicated region
  $region26: #{smooth_l1.1} parent=0 // pred_check
    _
  $region27: #{smooth_l1.1} parent=0 // pred_check_branch
    %764 = sbr.rel (0) target = $region29
  $region28: #{smooth_l1.1} parent=0 // pred_region
    _
  $region29: #{smooth_l1.1} parent=0 // pred_fallthru
    _

</llo_original>
